<compile_context>
chip_gen: v7x
topology: tpu7x:2x2x1
jax: 0.10.0
libtpu: 0.0.40
codegen_flags: <defaults>
</compile_context>

<pallas_src>
import jax
import jax.numpy as jnp
import numpy as np
from jax.experimental import pallas as pl
from jax.experimental.pallas import tpu as pltpu


def memory_write_kernel(src_ref,                      # SMEM (Ep,) int32 (prefetch)
                        dst_ref, rel_ref, q_ref, h_ref,
                        wnh_ref, wnq_ref, whf_ref, wrf_ref, bdeg_ref, bnode_ref,
                        out_ref,
                        hsrc_buf, hs_acc, rs_acc, deg_acc):
    f32, bf16 = jnp.float32, jnp.bfloat16
    i = pl.program_id(0)                  # node tile  ("parallel")
    k = pl.program_id(1)                  # edge tile  ("arbitrary", reduction)
    TN, M = hs_acc.shape
    TE = hsrc_buf.shape[0]

    # ---- init resident accumulators on the first edge tile -----------------
    @pl.when(k == 0)
    def _init():
        hs_acc[...] = jnp.zeros_like(hs_acc)
        rs_acc[...] = jnp.zeros_like(rs_acc)
        deg_acc[...] = jnp.zeros_like(deg_acc)

    # ---- index-based source gather for this edge tile ----------------------
    base = k * TE

    def gather_row(e, carry):
        s = src_ref[base + e]                               # SMEM scalar read
        hsrc_buf[pl.ds(e, 1), :] = h_ref[pl.ds(s, 1), :]    # one (1, M) row copy
        return carry

    jax.lax.fori_loop(0, TE, gather_row, 0)

    # ---- per-tile dst one-hot scatter-sum on the MXU ------------------------
    # Padded edges carry dst = -1 and therefore match no node row.
    node_gid = i * TN + jax.lax.broadcasted_iota(jnp.int32, (TN, TE), 0)
    hit = node_gid == dst_ref[...]                          # (TN, TE) vs (1, TE)
    oh_f = jnp.where(hit, 1.0, 0.0).astype(f32)             # exact 0 / 1
    oh_b = oh_f.astype(bf16)
    hs_acc[...] += jnp.dot(oh_b, hsrc_buf[...].astype(bf16),
                           preferred_element_type=f32)      # sum_{e->n} h[src[e]]
    rs_acc[...] += jnp.dot(oh_b, rel_ref[...],
                           preferred_element_type=f32)      # sum_{e->n} rel[e]
    deg_acc[...] += jnp.sum(oh_f, axis=1, keepdims=True)    # in-degree

    # ---- epilogue: folded node update on the last edge tile -----------------
    @pl.when(k == pl.num_programs(1) - 1)
    def _finalize():
        row0 = pl.multiple_of(i * TN, TN)
        h_old = h_ref[pl.ds(row0, TN), :]                   # exact f32 old memory
        deg = deg_acc[...]                                  # (TN, 1) mask column
        # TODO(synk): for graphs with large in-degree keep the hs/rs fold dots
        # in f32 instead of casting the aggregated sums to bf16.
        new_h = (jnp.dot(h_old.astype(bf16), wnh_ref[...], preferred_element_type=f32)
                 + jnp.dot(q_ref[...], wnq_ref[...], preferred_element_type=f32)
                 + jnp.dot(hs_acc[...].astype(bf16), whf_ref[...],
                           preferred_element_type=f32)
                 + jnp.dot(rs_acc[...].astype(bf16), wrf_ref[...],
                           preferred_element_type=f32)
                 + deg * bdeg_ref[...]
                 + bnode_ref[...])
        new_h = jnp.maximum(new_h, 0.0)
        # DGL update_all: nodes with zero in-degree keep their old memory.
        out_ref[...] = jnp.where(deg > 0.0, new_h, h_old)


def _round_up(x, m):
    return (x + m - 1) // m * m


def prepare_operands(h, q, rel, src_idx, dst_idx, params):
    """Fold the four Linear layers to node scale and pad / cast kernel operands."""
    wmsg, bmsg, wmem, bmem, wq, bq, wall, ball = params
    f32, bf16 = jnp.float32, jnp.bfloat16

    N, M = h.shape
    Q = q.shape[1]
    E, R = rel.shape
    H = wq.shape[1]

    TN = min(128, _round_up(N, 16))      # node tile: bf16 sublane packing (16)
    TE = 128                             # edge tile: lane-dense dst-id block
    Np = _round_up(N, TN)
    Ep = _round_up(E, TE)

    def pad_rows(a, rows):
        return jnp.pad(a, ((0, rows - a.shape[0]), (0, 0)))

    # Graph indices. Padded edges: src -> 0 (harmless), dst -> -1 (matches nothing).
    src_pad = jnp.pad(src_idx.astype(jnp.int32), (0, Ep - E))
    dst_pad = jnp.pad(dst_idx.astype(jnp.int32), (0, Ep - E), constant_values=-1)
    dst2d = dst_pad[None, :]                                          # (1, Ep)

    # Features. h stays a single f32 copy: gather source, node-update input and
    # exact passthrough for zero-in-degree nodes (no duplicated h operands).
    rel_b = pad_rows(rel, Ep).astype(bf16)                            # (Ep, R)
    q_b = pad_rows(q, Np).astype(bf16)                                # (Np, Q)
    h_f32 = pad_rows(h, Np).astype(f32)                               # (Np, M)

    # Fold W_query / W_mem / W_msg through W_all (message path is linear, so the
    # per-edge projection moves to node scale — exact pre-relu identity in f32).
    wall_q, wall_m, wall_a = wall[:H], wall[H:2 * H], wall[2 * H:]
    w_nh = (wmem @ wall_m).astype(bf16)                               # (M, M)
    w_nq = (wq @ wall_q).astype(bf16)                                 # (Q, M)
    w_hf = (wmsg[:M] @ wall_a).astype(bf16)                           # (M, M)
    w_rf = (wmsg[M:] @ wall_a).astype(bf16)                           # (R, M)
    b_deg = (bmsg @ wall_a).astype(f32)                               # (1, M)
    b_node = (bq @ wall_q + bmem @ wall_m + ball).astype(f32)         # (1, M)

    ops = (src_pad, dst2d, rel_b, q_b, h_f32,
           w_nh, w_nq, w_hf, w_rf, b_deg, b_node)
    dims = dict(N=N, M=M, Q=Q, E=E, R=R, H=H, Np=Np, Ep=Ep, TN=TN, TE=TE)
    return ops, dims


def _vmem_limit_bytes():
    """Per-generation scoped-VMEM budget (defaults 16/32 MiB are << physical)."""
    try:
        kind = jax.devices()[0].device_kind.lower()
    except Exception:
        return None
    if "v7" in kind:
        return 48 * 1024 * 1024          # 64 MiB physical per TensorCore
    if "v5" in kind or "v6" in kind:
        return 96 * 1024 * 1024          # 128 MiB physical
    return None


def memory_write(h, q, rel, src_idx, dst_idx, params):
    ops, d = prepare_operands(h, q, rel, src_idx, dst_idx, params)
    N, M, Q, R = d["N"], d["M"], d["Q"], d["R"]
    Np, Ep, TN, TE = d["Np"], d["Ep"], d["TN"], d["TE"]
    NI, KE = Np // TN, Ep // TE

    grid_spec = pltpu.PrefetchScalarGridSpec(
        num_scalar_prefetch=1,                                 # src ids -> SMEM
        grid=(NI, KE),                                         # (node, edge) tiles
        in_specs=[
            pl.BlockSpec((1, TE), lambda i, k, src: (0, k)),   # dst ids (edge tile)
            pl.BlockSpec((TE, R), lambda i, k, src: (k, 0)),   # rel     (edge tile)
            pl.BlockSpec((TN, Q), lambda i, k, src: (i, 0)),   # q       (node tile)
            pl.BlockSpec((Np, M), lambda i, k, src: (0, 0)),   # h (VMEM-resident)
            pl.BlockSpec((M, M),  lambda i, k, src: (0, 0)),   # Wmem  @ Wall_m
            pl.BlockSpec((Q, M),  lambda i, k, src: (0, 0)),   # Wq    @ Wall_q
            pl.BlockSpec((M, M),  lambda i, k, src: (0, 0)),   # Wmsg_h@ Wall_a
            pl.BlockSpec((R, M),  lambda i, k, src: (0, 0)),   # Wmsg_r@ Wall_a
            pl.BlockSpec((1, M),  lambda i, k, src: (0, 0)),   # bmsg  @ Wall_a
            pl.BlockSpec((1, M),  lambda i, k, src: (0, 0)),   # fused node bias
        ],
        out_specs=pl.BlockSpec((TN, M), lambda i, k, src: (i, 0)),
        scratch_shapes=[
            pltpu.VMEM((TE, M), jnp.float32),    # gathered h[src] rows
            pltpu.VMEM((TN, M), jnp.float32),    # hs accumulator
            pltpu.VMEM((TN, R), jnp.float32),    # rs accumulator
            pltpu.VMEM((TN, 1), jnp.float32),    # in-degree accumulator
        ],
    )

    # Updated cost estimate for the index-gather / folded formulation.
    flops = (2 * NI * KE * TN * TE * (M + R)          # per-tile one-hot scatter dots
             + 2 * NI * TN * M * (M + Q + M + R))     # folded node update
    edge_bytes = sum(int(ops[j].size) * ops[j].dtype.itemsize for j in (0, 1, 2))
    node_bytes = sum(int(a.size) * a.dtype.itemsize for a in ops[3:])
    bytes_accessed = int(NI * edge_bytes + node_bytes + Np * M * 4)

    cp_kwargs = dict(dimension_semantics=("parallel", "arbitrary"))
    limit = _vmem_limit_bytes()
    if limit is not None:
        cp_kwargs["vmem_limit_bytes"] = limit

    out = pl.pallas_call(
        memory_write_kernel,
        out_shape=jax.ShapeDtypeStruct((Np, M), jnp.float32),
        grid_spec=grid_spec,
        compiler_params=pltpu.CompilerParams(**cp_kwargs),
        cost_estimate=pl.CostEstimate(flops=flops, transcendentals=0,
                                      bytes_accessed=bytes_accessed),
    )(*ops)
    return out[:N, :M]


def emulate_mixed_precision(ops, dims):
    """Plain-jnp replica of the exact kernel math (same operands / casts)."""
    (src_pad, dst2d, rel_b, q_b, h_f32,
     w_nh, w_nq, w_hf, w_rf, b_deg, b_node) = ops
    f32, bf16 = jnp.float32, jnp.bfloat16
    Np = h_f32.shape[0]
    node_ids = jnp.arange(Np, dtype=jnp.int32)[:, None]
    oh = jnp.where(node_ids == dst2d, 1.0, 0.0).astype(f32)        # (Np, Ep)
    oh_b = oh.astype(bf16)
    hsrc = h_f32[src_pad].astype(bf16)                             # (Ep, M)
    hs = jnp.dot(oh_b, hsrc, preferred_element_type=f32)
    rs = jnp.dot(oh_b, rel_b, preferred_element_type=f32)
    deg = jnp.sum(oh, axis=1, keepdims=True)
    new_h = (jnp.dot(h_f32.astype(bf16), w_nh, preferred_element_type=f32)
             + jnp.dot(q_b, w_nq, preferred_element_type=f32)
             + jnp.dot(hs.astype(bf16), w_hf, preferred_element_type=f32)
             + jnp.dot(rs.astype(bf16), w_rf, preferred_element_type=f32)
             + deg * b_deg + b_node)
    new_h = jnp.maximum(new_h, 0.0)
    out = jnp.where(deg > 0.0, new_h, h_f32)
    return out[:dims["N"], :dims["M"]]


def reference_f32(h, q, rel, src_idx, dst_idx, params):
    """Exact f32 semantics of the original PyTorch/DGL module."""
    wmsg, bmsg, wmem, bmem, wq, bq, wall, ball = params
    src_h = h[src_idx]
    msg = jnp.concatenate([src_h, rel], axis=1) @ wmsg + bmsg
    agg = jnp.zeros((h.shape[0], msg.shape[1]), jnp.float32).at[dst_idx].add(msg)
    qh = q @ wq + bq
    mh = h @ wmem + bmem
    new_h = jax.nn.relu(jnp.concatenate([qh, mh, agg], axis=1) @ wall + ball)
    indeg = jnp.zeros((h.shape[0],), jnp.float32).at[dst_idx].add(1.0)
    return jnp.where((indeg > 0)[:, None], new_h, h)


if __name__ == "__main__":
    # Sizes implied by MemoryWrite.__init__ / forward.
    memory_size, query_size, relation_size, hidden_size = 16, 8, 8, 32

    # Two memory graphs (query graph therefore has 2 nodes), batched DGL-style.
    #   graph 0: nodes 0-2, edges 0->1, 0->2, 1->2   (node 0 has in-degree 0)
    #   graph 1: nodes 3-6, edges 3->4, 4->5, 5->6, 6->3, 4->6, 3->6
    src_idx = jnp.asarray(np.array([0, 0, 1, 3, 4, 5, 6, 4, 3], dtype=np.int32))
    dst_idx = jnp.asarray(np.array([1, 2, 2, 4, 5, 6, 3, 6, 6], dtype=np.int32))
    graph_of_node = np.array([0, 0, 0, 1, 1, 1, 1], dtype=np.int32)
    N, E = 7, int(src_idx.shape[0])

    key = jax.random.PRNGKey(0)
    ks = jax.random.split(key, 12)

    h = jax.random.normal(ks[0], (N, memory_size), jnp.float32)
    rel = jax.random.normal(ks[1], (E, relation_size), jnp.float32)
    query_h = jax.random.normal(ks[2], (2, query_size), jnp.float32)
    q = query_h[graph_of_node]    # each memory node gets its graph's query feature

    def linear(kw, kb, fan_in, fan_out):
        bound = 1.0 / np.sqrt(fan_in)
        w = jax.random.uniform(kw, (fan_in, fan_out), jnp.float32, -bound, bound)
        b = jax.random.uniform(kb, (1, fan_out), jnp.float32, -bound, bound)
        return w, b

    wmsg, bmsg = linear(ks[3], ks[4], memory_size + relation_size, hidden_size)
    wmem, bmem = linear(ks[5], ks[6], memory_size, hidden_size)
    wq, bq = linear(ks[7], ks[8], query_size, hidden_size)
    wall, ball = linear(ks[9], ks[10], 3 * hidden_size, memory_size)
    params = (wmsg, bmsg, wmem, bmem, wq, bq, wall, ball)

    out = memory_write(h, q, rel, src_idx, dst_idx, params)
    out = jax.block_until_ready(out)

    # Tight check: kernel vs. a plain-jnp replica of the exact same mixed-
    # precision computation (validates the kernel mechanics / gather / scatter).
    ops, dims = prepare_operands(h, q, rel, src_idx, dst_idx, params)
    emu = emulate_mixed_precision(ops, dims)
    np.testing.assert_allclose(np.asarray(out), np.asarray(emu),
                               rtol=1e-3, atol=1e-3)

    # Loose check: kernel vs. pure-f32 module semantics (validates that the
    # bf16 operands + the linear-layer folding preserve the forward pass).
    ref = reference_f32(h, q, rel, src_idx, dst_idx, params)
    np.testing.assert_allclose(np.asarray(out), np.asarray(ref),
                               rtol=5e-2, atol=5e-2)

    print("KERNEL_OK")
</pallas_src>

<mosaic_0001>
module attributes {stable_mosaic.version = 11 : i64} {
  func.func @memory_write_kernel(%arg0: i32, %arg1: i32, %arg2: memref<128xi32, #tpu.memory_space<smem>>, %arg3: memref<1x128xi32, #tpu.memory_space<vmem>>, %arg4: memref<128x8xbf16, #tpu.memory_space<vmem>>, %arg5: memref<16x8xbf16, #tpu.memory_space<vmem>>, %arg6: memref<16x16xf32, #tpu.memory_space<vmem>>, %arg7: memref<16x16xbf16, #tpu.memory_space<vmem>>, %arg8: memref<8x16xbf16, #tpu.memory_space<vmem>>, %arg9: memref<16x16xbf16, #tpu.memory_space<vmem>>, %arg10: memref<8x16xbf16, #tpu.memory_space<vmem>>, %arg11: memref<1x16xf32, #tpu.memory_space<vmem>>, %arg12: memref<1x16xf32, #tpu.memory_space<vmem>>, %arg13: memref<16x16xf32, #tpu.memory_space<vmem>>, %arg14: memref<128x16xf32, #tpu.memory_space<vmem>>, %arg15: memref<16x16xf32, #tpu.memory_space<vmem>>, %arg16: memref<16x8xf32, #tpu.memory_space<vmem>>, %arg17: memref<16x1xf32, #tpu.memory_space<vmem>>) attributes {dimension_semantics = [#tpu.dimension_semantics<parallel>, #tpu.dimension_semantics<arbitrary>], iteration_bounds = array<i64: 1, 1>, scalar_prefetch = 1 : i64, scratch_operands = 4 : i64, tpu.core_type = #tpu.core_type<tc>, window_params = [{transform_indices = @transform_0, window_bounds = array<i64: 1, 128>}, {transform_indices = @transform_1, window_bounds = array<i64: 128, 8>}, {transform_indices = @transform_2, window_bounds = array<i64: 16, 8>}, {pipeline_mode = #tpu.pipeline_mode<synchronous>, transform_indices = @transform_3, window_bounds = array<i64: 16, 16>}, {pipeline_mode = #tpu.pipeline_mode<synchronous>, transform_indices = @transform_4, window_bounds = array<i64: 16, 16>}, {pipeline_mode = #tpu.pipeline_mode<synchronous>, transform_indices = @transform_5, window_bounds = array<i64: 8, 16>}, {pipeline_mode = #tpu.pipeline_mode<synchronous>, transform_indices = @transform_6, window_bounds = array<i64: 16, 16>}, {pipeline_mode = #tpu.pipeline_mode<synchronous>, transform_indices = @transform_7, window_bounds = array<i64: 8, 16>}, {pipeline_mode = #tpu.pipeline_mode<synchronous>, transform_indices = @transform_8, window_bounds = array<i64: 1, 16>}, {pipeline_mode = #tpu.pipeline_mode<synchronous>, transform_indices = @transform_9, window_bounds = array<i64: 1, 16>}, {transform_indices = @transform_10, window_bounds = array<i64: 16, 16>}]} {
    %c0_i32 = arith.constant 0 : i32
    %0 = arith.cmpi eq, %arg1, %c0_i32 : i32
    %1 = arith.extui %0 : i1 to i32
    %c0_i32_0 = arith.constant 0 : i32
    %2 = arith.cmpi ne, %1, %c0_i32_0 : i32
    scf.if %2 {
      %cst_27 = arith.constant 0.000000e+00 : f32
      %35 = vector.broadcast %cst_27 : f32 to vector<16x16xf32>
      %c0_28 = arith.constant 0 : index
      %c0_29 = arith.constant 0 : index
      %36 = vector.load %arg15[%c0_28, %c0_29] : memref<16x16xf32, #tpu.memory_space<vmem>>, vector<16x16xf32>
      tpu.vector_store %arg15[%c0_28, %c0_29], %35 {strides = array<i32>} : memref<16x16xf32, #tpu.memory_space<vmem>>, vector<16x16xf32>,
      %cst_30 = arith.constant 0.000000e+00 : f32
      %37 = vector.broadcast %cst_30 : f32 to vector<16x8xf32>
      %c0_31 = arith.constant 0 : index
      %c0_32 = arith.constant 0 : index
      %38 = vector.load %arg16[%c0_31, %c0_32] : memref<16x8xf32, #tpu.memory_space<vmem>>, vector<16x8xf32>
      tpu.vector_store %arg16[%c0_31, %c0_32], %37 {strides = array<i32>} : memref<16x8xf32, #tpu.memory_space<vmem>>, vector<16x8xf32>,
      %cst_33 = arith.constant 0.000000e+00 : f32
      %39 = vector.broadcast %cst_33 : f32 to vector<16x1xf32>
      %c0_34 = arith.constant 0 : index
      %c0_35 = arith.constant 0 : index
      %40 = vector.load %arg17[%c0_34, %c0_35] : memref<16x1xf32, #tpu.memory_space<vmem>>, vector<16x1xf32>
      tpu.vector_store %arg17[%c0_34, %c0_35], %39 {strides = array<i32>} : memref<16x1xf32, #tpu.memory_space<vmem>>, vector<16x1xf32>,
    } else {
    }
    %c128_i32 = arith.constant 128 : i32
    %3 = arith.muli %arg1, %c128_i32 : i32
    %c0_i32_1 = arith.constant 0 : i32
    %c128_i32_2 = arith.constant 128 : i32
    %4 = arith.addi %c0_i32_1, %c128_i32_2 : i32
    %c1_i32 = arith.constant 1 : i32
    scf.for %arg18 = %c0_i32_1 to %4 step %c1_i32  : i32 {
      %35 = arith.addi %3, %arg18 : i32
      %36 = arith.index_cast %35 : i32 to index
      %37 = memref.load %arg2[%36] : memref<128xi32, #tpu.memory_space<smem>>
      %38 = arith.index_cast %37 : i32 to index
      %c0_27 = arith.constant 0 : index
      %39 = vector.load %arg6[%38, %c0_27] : memref<16x16xf32, #tpu.memory_space<vmem>>, vector<1x16xf32>
      %40 = arith.index_cast %arg18 : i32 to index
      %c0_28 = arith.constant 0 : index
      %41 = vector.load %arg14[%40, %c0_28] : memref<128x16xf32, #tpu.memory_space<vmem>>, vector<1x16xf32>
      tpu.vector_store %arg14[%40, %c0_28], %39 {strides = array<i32>} : memref<128x16xf32, #tpu.memory_space<vmem>>, vector<1x16xf32>,
    }
    %c128_i32_3 = arith.constant 128 : i32
    %c16_i32 = arith.constant 16 : i32
    %5 = arith.muli %arg0, %c16_i32 : i32
    %6 = tpu.iota {dimensions = array<i32: 0>} : vector<16x128xi32>
    %7 = vector.broadcast %5 : i32 to vector<16x128xi32>
    %8 = arith.addi %7, %6 : vector<16x128xi32>
    %c0 = arith.constant 0 : index
    %c0_4 = arith.constant 0 : index
    %9 = vector.load %arg3[%c0, %c0_4] : memref<1x128xi32, #tpu.memory_space<vmem>>, vector<1x128xi32>
    %10 = vector.broadcast %9 : vector<1x128xi32> to vector<16x128xi32>
    %11 = arith.cmpi eq, %8, %10 : vector<16x128xi32>
    %cst = arith.constant 1.000000e+00 : f32
    %cst_5 = arith.constant 0.000000e+00 : f32
    %12 = vector.broadcast %cst : f32 to vector<16x128xf32>
    %13 = vector.broadcast %cst_5 : f32 to vector<16x128xf32>
    %14 = arith.select %11, %12, %13 : vector<16x128xi1>, vector<16x128xf32>
    %15 = arith.truncf %14 : vector<16x128xf32> to vector<16x128xbf16>
    %c0_6 = arith.constant 0 : index
    %c0_7 = arith.constant 0 : index
    %16 = vector.load %arg15[%c0_6, %c0_7] : memref<16x16xf32, #tpu.memory_space<vmem>>, vector<16x16xf32>
    %c0_8 = arith.constant 0 : index
    %c0_9 = arith.constant 0 : index
    %17 = vector.load %arg14[%c0_8, %c0_9] : memref<128x16xf32, #tpu.memory_space<vmem>>, vector<128x16xf32>
    %18 = arith.truncf %17 : vector<128x16xf32> to vector<128x16xbf16>
    %cst_10 = arith.constant dense<0.000000e+00> : vector<16x16xf32>
    %19 = tpu.matmul %15, %18, %cst_10 {dimension_numbers = #tpu.dot_dimension_numbers<[1], [0], [0], [1], [0, 0, 1, 1], [], []>} : vector<16x128xbf16>, vector<128x16xbf16>, vector<16x16xf32> -> vector<16x16xf32>
    %20 = arith.addf %16, %19 : vector<16x16xf32>
    %c0_11 = arith.constant 0 : index
    %c0_12 = arith.constant 0 : index
    %21 = vector.load %arg15[%c0_11, %c0_12] : memref<16x16xf32, #tpu.memory_space<vmem>>, vector<16x16xf32>
    tpu.vector_store %arg15[%c0_11, %c0_12], %20 {strides = array<i32>} : memref<16x16xf32, #tpu.memory_space<vmem>>, vector<16x16xf32>,
    %c0_13 = arith.constant 0 : index
    %c0_14 = arith.constant 0 : index
    %22 = vector.load %arg16[%c0_13, %c0_14] : memref<16x8xf32, #tpu.memory_space<vmem>>, vector<16x8xf32>
    %c0_15 = arith.constant 0 : index
    %c0_16 = arith.constant 0 : index
    %23 = vector.load %arg4[%c0_15, %c0_16] : memref<128x8xbf16, #tpu.memory_space<vmem>>, vector<128x8xbf16>
    %cst_17 = arith.constant dense<0.000000e+00> : vector<16x8xf32>
    %24 = tpu.matmul %15, %23, %cst_17 {dimension_numbers = #tpu.dot_dimension_numbers<[1], [0], [0], [1], [0, 0, 1, 1], [], []>} : vector<16x128xbf16>, vector<128x8xbf16>, vector<16x8xf32> -> vector<16x8xf32>
    %25 = arith.addf %22, %24 : vector<16x8xf32>
    %c0_18 = arith.constant 0 : index
    %c0_19 = arith.constant 0 : index
    %26 = vector.load %arg16[%c0_18, %c0_19] : memref<16x8xf32, #tpu.memory_space<vmem>>, vector<16x8xf32>
    tpu.vector_store %arg16[%c0_18, %c0_19], %25 {strides = array<i32>} : memref<16x8xf32, #tpu.memory_space<vmem>>, vector<16x8xf32>,
    %c0_20 = arith.constant 0 : index
    %c0_21 = arith.constant 0 : index
    %27 = vector.load %arg17[%c0_20, %c0_21] : memref<16x1xf32, #tpu.memory_space<vmem>>, vector<16x1xf32>
    %cst_22 = arith.constant dense<0.000000e+00> : vector<16xf32>
    %28 = vector.multi_reduction <add>, %14, %cst_22 [1] : vector<16x128xf32> to vector<16xf32>
    %29 = vector.shape_cast %28 : vector<16xf32> to vector<16x1xf32>
    %30 = arith.addf %27, %29 : vector<16x1xf32>
    %c0_23 = arith.constant 0 : index
    %c0_24 = arith.constant 0 : index
    %31 = vector.load %arg17[%c0_23, %c0_24] : memref<16x1xf32, #tpu.memory_space<vmem>>, vector<16x1xf32>
    tpu.vector_store %arg17[%c0_23, %c0_24], %30 {strides = array<i32>} : memref<16x1xf32, #tpu.memory_space<vmem>>, vector<16x1xf32>,
    %c0_i32_25 = arith.constant 0 : i32
    %32 = arith.cmpi eq, %arg1, %c0_i32_25 : i32
    %33 = arith.extui %32 : i1 to i32
    %c0_i32_26 = arith.constant 0 : i32
    %34 = arith.cmpi ne, %33, %c0_i32_26 : i32
    scf.if %34 {
      %c16_i32_27 = arith.constant 16 : i32
      %35 = arith.muli %arg0, %c16_i32_27 : i32
      %36 = tpu.assume_multiple %35, 16 : i32
      %37 = arith.index_cast %36 : i32 to index
      %c0_28 = arith.constant 0 : index
      %38 = vector.load %arg6[%37, %c0_28] : memref<16x16xf32, #tpu.memory_space<vmem>>, vector<16x16xf32>
      %c0_29 = arith.constant 0 : index
      %c0_30 = arith.constant 0 : index
      %39 = vector.load %arg17[%c0_29, %c0_30] : memref<16x1xf32, #tpu.memory_space<vmem>>, vector<16x1xf32>
      %40 = arith.truncf %38 : vector<16x16xf32> to vector<16x16xbf16>
      %c0_31 = arith.constant 0 : index
      %c0_32 = arith.constant 0 : index
      %41 = vector.load %arg7[%c0_31, %c0_32] : memref<16x16xbf16, #tpu.memory_space<vmem>>, vector<16x16xbf16>
      %cst_33 = arith.constant dense<0.000000e+00> : vector<16x16xf32>
      %42 = tpu.matmul %40, %41, %cst_33 {dimension_numbers = #tpu.dot_dimension_numbers<[1], [0], [0], [1], [0, 0, 1, 1], [], []>} : vector<16x16xbf16>, vector<16x16xbf16>, vector<16x16xf32> -> vector<16x16xf32>
      %c0_34 = arith.constant 0 : index
      %c0_35 = arith.constant 0 : index
      %43 = vector.load %arg5[%c0_34, %c0_35] : memref<16x8xbf16, #tpu.memory_space<vmem>>, vector<16x8xbf16>
      %c0_36 = arith.constant 0 : index
      %c0_37 = arith.constant 0 : index
      %44 = vector.load %arg8[%c0_36, %c0_37] : memref<8x16xbf16, #tpu.memory_space<vmem>>, vector<8x16xbf16>
      %cst_38 = arith.constant dense<0.000000e+00> : vector<16x16xf32>
      %45 = tpu.matmul %43, %44, %cst_38 {dimension_numbers = #tpu.dot_dimension_numbers<[1], [0], [0], [1], [0, 0, 1, 1], [], []>} : vector<16x8xbf16>, vector<8x16xbf16>, vector<16x16xf32> -> vector<16x16xf32>
      %46 = arith.addf %42, %45 : vector<16x16xf32>
      %c0_39 = arith.constant 0 : index
      %c0_40 = arith.constant 0 : index
      %47 = vector.load %arg15[%c0_39, %c0_40] : memref<16x16xf32, #tpu.memory_space<vmem>>, vector<16x16xf32>
      %48 = arith.truncf %47 : vector<16x16xf32> to vector<16x16xbf16>
      %c0_41 = arith.constant 0 : index
      %c0_42 = arith.constant 0 : index
      %49 = vector.load %arg9[%c0_41, %c0_42] : memref<16x16xbf16, #tpu.memory_space<vmem>>, vector<16x16xbf16>
      %cst_43 = arith.constant dense<0.000000e+00> : vector<16x16xf32>
      %50 = tpu.matmul %48, %49, %cst_43 {dimension_numbers = #tpu.dot_dimension_numbers<[1], [0], [0], [1], [0, 0, 1, 1], [], []>} : vector<16x16xbf16>, vector<16x16xbf16>, vector<16x16xf32> -> vector<16x16xf32>
      %51 = arith.addf %46, %50 : vector<16x16xf32>
      %c0_44 = arith.constant 0 : index
      %c0_45 = arith.constant 0 : index
      %52 = vector.load %arg16[%c0_44, %c0_45] : memref<16x8xf32, #tpu.memory_space<vmem>>, vector<16x8xf32>
      %53 = arith.truncf %52 : vector<16x8xf32> to vector<16x8xbf16>
      %c0_46 = arith.constant 0 : index
      %c0_47 = arith.constant 0 : index
      %54 = vector.load %arg10[%c0_46, %c0_47] : memref<8x16xbf16, #tpu.memory_space<vmem>>, vector<8x16xbf16>
      %cst_48 = arith.constant dense<0.000000e+00> : vector<16x16xf32>
      %55 = tpu.matmul %53, %54, %cst_48 {dimension_numbers = #tpu.dot_dimension_numbers<[1], [0], [0], [1], [0, 0, 1, 1], [], []>} : vector<16x8xbf16>, vector<8x16xbf16>, vector<16x16xf32> -> vector<16x16xf32>
      %56 = arith.addf %51, %55 : vector<16x16xf32>
      %c0_49 = arith.constant 0 : index
      %c0_50 = arith.constant 0 : index
      %57 = vector.load %arg11[%c0_49, %c0_50] : memref<1x16xf32, #tpu.memory_space<vmem>>, vector<1x16xf32>
      %58 = vector.broadcast %39 : vector<16x1xf32> to vector<16x16xf32>
      %59 = vector.broadcast %57 : vector<1x16xf32> to vector<16x16xf32>
      %60 = arith.mulf %58, %59 : vector<16x16xf32>
      %61 = arith.addf %56, %60 : vector<16x16xf32>
      %c0_51 = arith.constant 0 : index
      %c0_52 = arith.constant 0 : index
      %62 = vector.load %arg12[%c0_51, %c0_52] : memref<1x16xf32, #tpu.memory_space<vmem>>, vector<1x16xf32>
      %63 = vector.broadcast %62 : vector<1x16xf32> to vector<16x16xf32>
      %64 = arith.addf %61, %63 : vector<16x16xf32>
      %cst_53 = arith.constant 0.000000e+00 : f32
      %65 = vector.broadcast %cst_53 : f32 to vector<16x16xf32>
      %66 = arith.maximumf %64, %65 : vector<16x16xf32>
      %cst_54 = arith.constant 0.000000e+00 : f32
      %67 = vector.broadcast %cst_54 : f32 to vector<16x1xf32>
      %68 = arith.cmpf ogt, %39, %67 : vector<16x1xf32>
      %69 = vector.shape_cast %68 : vector<16x1xi1> to vector<16x1xi1>
      %70 = vector.broadcast %69 : vector<16x1xi1> to vector<16x16xi1>
      %71 = arith.select %70, %66, %38 : vector<16x16xi1>, vector<16x16xf32>
      %c0_55 = arith.constant 0 : index
      %c0_56 = arith.constant 0 : index
      %72 = vector.load %arg13[%c0_55, %c0_56] : memref<16x16xf32, #tpu.memory_space<vmem>>, vector<16x16xf32>
      tpu.vector_store %arg13[%c0_55, %c0_56], %71 {strides = array<i32>} : memref<16x16xf32, #tpu.memory_space<vmem>>, vector<16x16xf32>,
    } else {
    }
    return
  }
  func.func @transform_0(%arg0: i32, %arg1: i32, %arg2: memref<128xi32, #tpu.memory_space<smem>>) -> (i32, i32) {
    %c0_i32 = arith.constant 0 : i32
    %c0_i32_0 = arith.constant 0 : i32
    return %c0_i32, %arg1 : i32, i32
  }
  func.func @transform_1(%arg0: i32, %arg1: i32, %arg2: memref<128xi32, #tpu.memory_space<smem>>) -> (i32, i32) {
    %c0_i32 = arith.constant 0 : i32
    %c0_i32_0 = arith.constant 0 : i32
    return %arg1, %c0_i32 : i32, i32
  }
  func.func @transform_2(%arg0: i32, %arg1: i32, %arg2: memref<128xi32, #tpu.memory_space<smem>>) -> (i32, i32) {
    %c0_i32 = arith.constant 0 : i32
    %c0_i32_0 = arith.constant 0 : i32
    return %arg0, %c0_i32 : i32, i32
  }
  func.func @transform_3(%arg0: i32, %arg1: i32, %arg2: memref<128xi32, #tpu.memory_space<smem>>) -> (i32, i32) {
    %c0_i32 = arith.constant 0 : i32
    %c0_i32_0 = arith.constant 0 : i32
    %c0_i32_1 = arith.constant 0 : i32
    return %c0_i32, %c0_i32_0 : i32, i32
  }
  func.func @transform_4(%arg0: i32, %arg1: i32, %arg2: memref<128xi32, #tpu.memory_space<smem>>) -> (i32, i32) {
    %c0_i32 = arith.constant 0 : i32
    %c0_i32_0 = arith.constant 0 : i32
    %c0_i32_1 = arith.constant 0 : i32
    return %c0_i32, %c0_i32_0 : i32, i32
  }
  func.func @transform_5(%arg0: i32, %arg1: i32, %arg2: memref<128xi32, #tpu.memory_space<smem>>) -> (i32, i32) {
    %c0_i32 = arith.constant 0 : i32
    %c0_i32_0 = arith.constant 0 : i32
    %c0_i32_1 = arith.constant 0 : i32
    return %c0_i32, %c0_i32_0 : i32, i32
  }
  func.func @transform_6(%arg0: i32, %arg1: i32, %arg2: memref<128xi32, #tpu.memory_space<smem>>) -> (i32, i32) {
    %c0_i32 = arith.constant 0 : i32
    %c0_i32_0 = arith.constant 0 : i32
    %c0_i32_1 = arith.constant 0 : i32
    return %c0_i32, %c0_i32_0 : i32, i32
  }
  func.func @transform_7(%arg0: i32, %arg1: i32, %arg2: memref<128xi32, #tpu.memory_space<smem>>) -> (i32, i32) {
    %c0_i32 = arith.constant 0 : i32
    %c0_i32_0 = arith.constant 0 : i32
    %c0_i32_1 = arith.constant 0 : i32
    return %c0_i32, %c0_i32_0 : i32, i32
  }
  func.func @transform_8(%arg0: i32, %arg1: i32, %arg2: memref<128xi32, #tpu.memory_space<smem>>) -> (i32, i32) {
    %c0_i32 = arith.constant 0 : i32
    %c0_i32_0 = arith.constant 0 : i32
    %c0_i32_1 = arith.constant 0 : i32
    return %c0_i32, %c0_i32_0 : i32, i32
  }
  func.func @transform_9(%arg0: i32, %arg1: i32, %arg2: memref<128xi32, #tpu.memory_space<smem>>) -> (i32, i32) {
    %c0_i32 = arith.constant 0 : i32
    %c0_i32_0 = arith.constant 0 : i32
    %c0_i32_1 = arith.constant 0 : i32
    return %c0_i32, %c0_i32_0 : i32, i32
  }
  func.func @transform_10(%arg0: i32, %arg1: i32, %arg2: memref<128xi32, #tpu.memory_space<smem>>) -> (i32, i32) {
    %c0_i32 = arith.constant 0 : i32
    %c0_i32_0 = arith.constant 0 : i32
    return %arg0, %c0_i32 : i32, i32
  }
}

</mosaic_0001>

<llo_original>
// kernel: tpu_custom_call.1
$region0: #{tpu_custom_call.1}
  #allocation0 [shape = 'u32[]', space=smem, size = 0x4, offset = 0x4, fixed_abs, tag = 'smem constant byte address 0x4 - core index']
  #allocation1 [shape = 'u32[144,128]{1,0:T(1,128)}', space=vmem, size = 0x12000, scoped, tag = 'internal scratch']
  #allocation2 [shape = 'f32[128,16]{1,0:T(8,128)}', space=vmem, size = 0x10000, scoped, tag = 'scratch operand']
  #allocation3 [shape = 'f32[16,16]{1,0:T(8,128)}', space=vmem, size = 0x2000, scoped, tag = 'scratch operand']
  #allocation4 [shape = 'f32[16,8]{1,0:T(8,128)}', space=vmem, size = 0x2000, scoped, tag = 'scratch operand']
  #allocation5 [shape = 'f32[16,1]{1,0:T(8,128)}', space=vmem, size = 0x2000, scoped, tag = 'scratch operand']
  #allocation6 [shape = 's32[1]{0}', space=sflag, size = 0x4, scoped, tag = 'scoped memory for tpu_custom_call.1']
  #allocation7 [shape = 'u8[512]{0}', space=smem, size = 0x200, scoped, tag = 'prefetched SMEM operand 0']
  %s0 = inlined_call_operand.vmem [shape: s32[128], index: 0, kind: input, shape index: {}]
  %s1 = inlined_call_operand.vmem [shape: s32[1,128], index: 1, kind: input, shape index: {}]
  %s2 = inlined_call_operand.vmem [shape: bf16[128,8], index: 2, kind: input, shape index: {}]
  %s3 = inlined_call_operand.vmem [shape: bf16[16,8], index: 3, kind: input, shape index: {}]
  %s4 = inlined_call_operand.vmem [shape: f32[16,16], index: 4, kind: input, shape index: {}]
  %s5 = inlined_call_operand.vmem [shape: bf16[16,16], index: 5, kind: input, shape index: {}]
  %s6 = inlined_call_operand.vmem [shape: bf16[8,16], index: 6, kind: input, shape index: {}]
  %s7 = inlined_call_operand.vmem [shape: bf16[16,16], index: 7, kind: input, shape index: {}]
  %s8 = inlined_call_operand.vmem [shape: bf16[8,16], index: 8, kind: input, shape index: {}]
  %s9 = inlined_call_operand.vmem [shape: f32[1,16], index: 9, kind: input, shape index: {}]
  %s10 = inlined_call_operand.vmem [shape: f32[1,16], index: 10, kind: input, shape index: {}]
  %s11 = inlined_call_operand.hbm [shape: f32[16,16], index: 11, kind: output, shape index: {}]
  %s12 = sld [smem:[#allocation0]]
  $region65: #{tpu_custom_call.1} parent=0
    _
  %s14 = ssub.s32 1, %s12
  %s15 = scalar_select 0, %s14, %s12
  %s16 = sshll.u32 %s0, 4
  %s17 = int_to_ptr.vmem [resolvable:$true] %s16
  %19 = dma.vmem_to_smem %s17, 16, [#allocation7], [#allocation6]
  %20 = dma.done [#allocation6], 16
  %21 = sfence
  $region1: #{tpu_custom_call.1} parent=0
    #allocation8 [shape = 'u8[8192]{0}', space=vmem, size = 0x2000, scoped, tag = 'output window, operand 0, single buffered']
    #allocation9 [shape = 's32[1]{0}', space=sflag, size = 0x4, scoped, tag = 'scoped memory for tpu_custom_call.1']
    %22 = vsyncpa [#allocation9], 0
    // Predicated region
    $region2: #{tpu_custom_call.1} parent=1 // pred_check
      _
    $region3: #{tpu_custom_call.1} parent=1 // pred_check_branch
      %24 = sbr.rel (0) target = $region5
    $region4: #{tpu_custom_call.1} parent=1 // pred_region
      _
    $region5: #{tpu_custom_call.1} parent=1 // pred_fallthru
      _
    // Predicated region
    $region6: #{tpu_custom_call.1} parent=1 // pred_check
      _
    $region7: #{tpu_custom_call.1} parent=1 // pred_check_branch
      %26 = sbr.rel (0) target = $region9
    $region8: #{tpu_custom_call.1} parent=1 // pred_region
      _
    $region9: #{tpu_custom_call.1} parent=1 // pred_fallthru
      _
    // Predicated region
    $region10: #{tpu_custom_call.1} parent=1 // pred_check
      _
    $region11: #{tpu_custom_call.1} parent=1 // pred_check_branch
      %28 = sbr.rel (0) target = $region13
    $region12: #{tpu_custom_call.1} parent=1 // pred_region
      _
    $region13: #{tpu_custom_call.1} parent=1 // pred_fallthru
      _
    // Predicated region
    $region14: #{tpu_custom_call.1} parent=1 // pred_check
      _
    $region15: #{tpu_custom_call.1} parent=1 // pred_check_branch
      %30 = sbr.rel (0) target = $region17
    $region16: #{tpu_custom_call.1} parent=1 // pred_region
      _
    $region17: #{tpu_custom_call.1} parent=1 // pred_fallthru
      _
    // Predicated region
    $region18: #{tpu_custom_call.1} parent=1 // pred_check
      _
    $region19: #{tpu_custom_call.1} parent=1 // pred_check_branch
      %32 = sbr.rel (0) target = $region21
    $region20: #{tpu_custom_call.1} parent=1 // pred_region
      _
    $region21: #{tpu_custom_call.1} parent=1 // pred_fallthru
      _
    // Predicated region
    $region22: #{tpu_custom_call.1} parent=1 // pred_check
      _
    $region23: #{tpu_custom_call.1} parent=1 // pred_check_branch
      %34 = sbr.rel (0) target = $region25
    $region24: #{tpu_custom_call.1} parent=1 // pred_region
      _
    $region25: #{tpu_custom_call.1} parent=1 // pred_fallthru
      _
    // Predicated region
    $region26: #{tpu_custom_call.1} parent=1 // pred_check
      _
    $region27: #{tpu_custom_call.1} parent=1 // pred_check_branch
      %36 = sbr.rel (0) target = $region29
    $region28: #{tpu_custom_call.1} parent=1 // pred_region
      _
    $region29: #{tpu_custom_call.1} parent=1 // pred_fallthru
      _
    // Predicated region
    $region30: #{tpu_custom_call.1} parent=1 // pred_check
      _
    $region31: #{tpu_custom_call.1} parent=1 // pred_check_branch
      %38 = sbr.rel (0) target = $region33
    $region32: #{tpu_custom_call.1} parent=1 // pred_region
      _
    $region33: #{tpu_custom_call.1} parent=1 // pred_fallthru
      _
    // Predicated region
    $region34: #{tpu_custom_call.1} parent=1 // pred_check
      _
    $region35: #{tpu_custom_call.1} parent=1 // pred_check_branch
      %40 = sbr.rel (0) target = $region37
    $region36: #{tpu_custom_call.1} parent=1 // pred_region
      _
    $region37: #{tpu_custom_call.1} parent=1 // pred_fallthru
      _
    // Predicated region
    $region38: #{tpu_custom_call.1} parent=1 // pred_check
      _
    $region39: #{tpu_custom_call.1} parent=1 // pred_check_branch
      %42 = sbr.rel (0) target = $region41
    $region40: #{tpu_custom_call.1} parent=1 // pred_region
      _
    $region41: #{tpu_custom_call.1} parent=1 // pred_fallthru
      _
    %p44 = scmp.eq.s32.totalorder 0, 0
    // Predicated region
    $region42: #{tpu_custom_call.1} parent=1 // pred_check
      %p45 = pneg %p44
    $region43: #{tpu_custom_call.1} parent=1 // pred_check_branch
      %47 = sbr.rel (%p45) target = $region45
    $region44: #{tpu_custom_call.1} parent=1 // pred_region
      %vm48 = vcmask 130048
      %49 = vst.msk [vmem:[#allocation3] sm:$0xff] %vm48, 0.0
      %50 = vst.msk [vmem:[#allocation3 + $0x8] sm:$0xff] %vm48, 0.0
      %vm51 = vcmask 64512
      %52 = vst.msk [vmem:[#allocation4] sm:$0xff] %vm51, 0.0
      %53 = vst.msk [vmem:[#allocation4 + $0x8] sm:$0xff] %vm51, 0.0
      %vm54 = vcmask 7168
      %55 = vst.msk [vmem:[#allocation5] sm:$0xff] %vm54, 0.0
      %56 = vst.msk [vmem:[#allocation5 + $0x8] sm:$0xff] %vm54, 0.0
    $region45: #{tpu_custom_call.1} parent=1 // pred_fallthru
      _
    %s57 = smul.u32 0, 128
    loop: start=0, step=1, limit=128
    $region46: #{tpu_custom_call.1} parent=1 // loop_pre_header
      _
    $region47: #{tpu_custom_call.1} parent=1 // loop_header
      %s59 = sphi 0, %s63
      %p60 = scmp.ge.s32.totalorder %s59, 128
    $region48: #{tpu_custom_call.1} parent=1 // loop_header_branch
      %62 = sbr.rel (%p60) target = $region52
    $region49: #{tpu_custom_call.1} parent=1 // loop_body
      %s64 = sadd.s32 %s57, %s59
      %s65 = sld [smem:[#allocation7 + %s64]]
      %s66 = scalar_lea.vmem %s4, %s65
      %v67 = vld [vmem:[%s66] sm:$0x1]
      %s68 = scalar_lea.vmem [#allocation2], %s59
      %vm69 = vcmask 122880
      %70 = vst.msk [vmem:[%s68] sm:$0x1] %vm69, %v67
    $region50: #{tpu_custom_call.1} parent=1 // loop_footer
      %s63 = sadd.s32 1, %s59
    $region51: #{tpu_custom_call.1} parent=1 // loop_footer_branch
      %58 = sbr.rel target = $region47
    $region52: #{tpu_custom_call.1} parent=1 // loop_exit
      _
    %s71 = smul.u32 0, 16
    %v72 = vlaneseq
    %v73 = vshrl.u32 %v72, 7
    %v74 = vadd.s32 %v73, 8
    %v75 = vstv %s71
    %v76 = vadd.s32 %v75, %v73
    %v77 = vadd.s32 %v75, %v74
    %v78 = vld [vmem:[%s1] sm:$0x1]
    %v79 = vlaneseq
    %v80 = vshrl.u32 %v79, 7
    %v81 = vsub.s32 0, %v80
    %v82 = vrot.slane %v78, %v81
    %vm83 = vcmp.eq.s32.totalorder %v76, %v82
    %vm84 = vcmp.eq.s32.totalorder %v77, %v82
    %v85 = vsel %vm83, 1.0, 0.0
    %v86 = vsel %vm84, 1.0, 0.0
    %v87 = vpack.c.bf16 %v86, %v85
    %v88 = vld [vmem:[#allocation3] sm:$0xff]
    %v89 = vld [vmem:[#allocation3 + $0x8] sm:$0xff]
    %v90 = vld [vmem:[#allocation2] sm:$0xff]
    %v91 = vld [vmem:[#allocation2 + $0x8] sm:$0xff]
    %v92 = vld [vmem:[#allocation2 + $0x10] sm:$0xff]
    %v93 = vld [vmem:[#allocation2 + $0x18] sm:$0xff]
    %v94 = vld [vmem:[#allocation2 + $0x20] sm:$0xff]
    %v95 = vld [vmem:[#allocation2 + $0x28] sm:$0xff]
    %v96 = vld [vmem:[#allocation2 + $0x30] sm:$0xff]
    %v97 = vld [vmem:[#allocation2 + $0x38] sm:$0xff]
    %v98 = vld [vmem:[#allocation2 + $0x40] sm:$0xff]
    %v99 = vld [vmem:[#allocation2 + $0x48] sm:$0xff]
    %v100 = vld [vmem:[#allocation2 + $0x50] sm:$0xff]
    %v101 = vld [vmem:[#allocation2 + $0x58] sm:$0xff]
    %v102 = vld [vmem:[#allocation2 + $0x60] sm:$0xff]
    %v103 = vld [vmem:[#allocation2 + $0x68] sm:$0xff]
    %v104 = vld [vmem:[#allocation2 + $0x70] sm:$0xff]
    %v105 = vld [vmem:[#allocation2 + $0x78] sm:$0xff]
    %v106 = vpack.c.bf16 %v91, %v90
    %v107 = vpack.c.bf16 %v93, %v92
    %v108 = vpack.c.bf16 %v95, %v94
    %v109 = vpack.c.bf16 %v97, %v96
    %v110 = vpack.c.bf16 %v99, %v98
    %v111 = vpack.c.bf16 %v101, %v100
    %v112 = vpack.c.bf16 %v103, %v102
    %v113 = vpack.c.bf16 %v105, %v104
    %114 = vmatprep.subr.bf16.mxu0 0
    %115 = vmatpush1.bf16.msra.mxu0 %v106
    %116 = vmatprep.subr.bf16.mxu0 0
    %117 = vmatpush1.bf16.msra.mxu0 %v107
    %118 = vmatprep.subr.bf16.mxu0 0
    %119 = vmatpush1.bf16.msra.mxu0 %v108
    %120 = vmatprep.subr.bf16.mxu0 0
    %121 = vmatpush1.bf16.msra.mxu0 %v109
    %122 = vmatprep.subr.bf16.mxu0 0
    %123 = vmatpush1.bf16.msra.mxu0 %v110
    %124 = vmatprep.subr.bf16.mxu0 0
    %125 = vmatpush1.bf16.msra.mxu0 %v111
    %126 = vmatprep.subr.bf16.mxu0 0
    %127 = vmatpush1.bf16.msra.mxu0 %v112
    %128 = vmatprep.subr.bf16.mxu0 0
    %129 = vmatpush1.bf16.msra.mxu0 %v113
    %130 = vmatprep.subr.bf16.mxu0 0
    %131 = vmatpush1.bf16.msra.mxu0 0
    %132 = vmatprep.subr.bf16.mxu0 0
    %133 = vmatpush1.bf16.msra.mxu0 0
    %134 = vmatprep.subr.bf16.mxu0 0
    %135 = vmatpush1.bf16.msra.mxu0 0
    %136 = vmatprep.subr.bf16.mxu0 0
    %137 = vmatpush1.bf16.msra.mxu0 0
    %138 = vmatprep.subr.bf16.mxu0 0
    %139 = vmatpush1.bf16.msra.mxu0 0
    %140 = vmatprep.subr.bf16.mxu0 0
    %141 = vmatpush1.bf16.msra.mxu0 0
    %142 = vmatprep.subr.bf16.mxu0 0
    %143 = vmatpush1.bf16.msra.mxu0 0
    %144 = vmatprep.subr.bf16.mxu0 0
    %145 = vmatpush1.bf16.msra.mxu0 0
    %146 = vmatprep.mubr.bf16.mxu0 0
    %147 = vmatmul.mubr.bf16.gmra.mrb[0].mxu0 %v87
    %v148 = vpop.f32.mrb[0].mxu0
    %v149 = vadd.f32 0.0, %v148
    %v150 = vpop.f32.mrb[0].mxu0
    %v151 = vpop.f32.mrb[0].mxu0
    %v152 = vadd.f32 0.0, %v151
    %v153 = vpop.f32.mrb[0].mxu0
    %154 = vdwg.mxu0
    %v155 = vadd.f32 %v88, %v149
    %v156 = vadd.f32 %v89, %v152
    %vm157 = vcmask 130048
    %158 = vst.msk [vmem:[#allocation3] sm:$0xff] %vm157, %v155
    %159 = vst.msk [vmem:[#allocation3 + $0x8] sm:$0xff] %vm157, %v156
    %v160 = vld [vmem:[#allocation4] sm:$0xff]
    %v161 = vld [vmem:[#allocation4 + $0x8] sm:$0xff]
    %v162 = vld [vmem:[%s2] sm:$0xf]
    %v163 = vld [vmem:[%s2 + $0x4] sm:$0xf]
    %v164 = vld [vmem:[%s2 + $0x8] sm:$0xf]
    %v165 = vld [vmem:[%s2 + $0xc] sm:$0xf]
    %v166 = vld [vmem:[%s2 + $0x10] sm:$0xf]
    %v167 = vld [vmem:[%s2 + $0x14] sm:$0xf]
    %v168 = vld [vmem:[%s2 + $0x18] sm:$0xf]
    %v169 = vld [vmem:[%s2 + $0x1c] sm:$0xf]
    %v170 = vld [vmem:[%s2 + $0x20] sm:$0xf]
    %v171 = vld [vmem:[%s2 + $0x24] sm:$0xf]
    %v172 = vld [vmem:[%s2 + $0x28] sm:$0xf]
    %v173 = vld [vmem:[%s2 + $0x2c] sm:$0xf]
    %v174 = vld [vmem:[%s2 + $0x30] sm:$0xf]
    %v175 = vld [vmem:[%s2 + $0x34] sm:$0xf]
    %v176 = vld [vmem:[%s2 + $0x38] sm:$0xf]
    %v177 = vld [vmem:[%s2 + $0x3c] sm:$0xf]
    %v194 = vunpack.c.l.b16 %v162
    %v195 = vunpack.c.l.b16 %v163
    %v196 = vunpack.c.l.b16 %v164
    %v197 = vunpack.c.l.b16 %v165
    %v198 = vunpack.c.l.b16 %v166
    %v199 = vunpack.c.l.b16 %v167
    %v200 = vunpack.c.l.b16 %v168
    %v201 = vunpack.c.l.b16 %v169
    %v202 = vunpack.c.l.b16 %v170
    %v203 = vunpack.c.l.b16 %v171
    %v204 = vunpack.c.l.b16 %v172
    %v205 = vunpack.c.l.b16 %v173
    %v206 = vunpack.c.l.b16 %v174
    %v207 = vunpack.c.l.b16 %v175
    %v208 = vunpack.c.l.b16 %v176
    %v209 = vunpack.c.l.b16 %v177
    %v210 = vpack.c.b16 %v195, %v194
    %v211 = vpack.c.b16 %v197, %v196
    %v212 = vpack.c.b16 %v199, %v198
    %v213 = vpack.c.b16 %v201, %v200
    %v214 = vpack.c.b16 %v203, %v202
    %v215 = vpack.c.b16 %v205, %v204
    %v216 = vpack.c.b16 %v207, %v206
    %v217 = vpack.c.b16 %v209, %v208
    %226 = vmatprep.subr.bf16.mxu0 0
    %227 = vmatpush1.bf16.msra.mxu0 %v210
    %228 = vmatprep.subr.bf16.mxu0 0
    %229 = vmatpush1.bf16.msra.mxu0 %v211
    %230 = vmatprep.subr.bf16.mxu0 0
    %231 = vmatpush1.bf16.msra.mxu0 %v212
    %232 = vmatprep.subr.bf16.mxu0 0
    %233 = vmatpush1.bf16.msra.mxu0 %v213
    %234 = vmatprep.subr.bf16.mxu0 0
    %235 = vmatpush1.bf16.msra.mxu0 %v214
    %236 = vmatprep.subr.bf16.mxu0 0
    %237 = vmatpush1.bf16.msra.mxu0 %v215
    %238 = vmatprep.subr.bf16.mxu0 0
    %239 = vmatpush1.bf16.msra.mxu0 %v216
    %240 = vmatprep.subr.bf16.mxu0 0
    %241 = vmatpush1.bf16.msra.mxu0 %v217
    %242 = vmatprep.subr.bf16.mxu0 0
    %243 = vmatpush1.bf16.msra.mxu0 0
    %244 = vmatprep.subr.bf16.mxu0 0
    %245 = vmatpush1.bf16.msra.mxu0 0
    %246 = vmatprep.subr.bf16.mxu0 0
    %247 = vmatpush1.bf16.msra.mxu0 0
    %248 = vmatprep.subr.bf16.mxu0 0
    %249 = vmatpush1.bf16.msra.mxu0 0
    %250 = vmatprep.subr.bf16.mxu0 0
    %251 = vmatpush1.bf16.msra.mxu0 0
    %252 = vmatprep.subr.bf16.mxu0 0
    %253 = vmatpush1.bf16.msra.mxu0 0
    %254 = vmatprep.subr.bf16.mxu0 0
    %255 = vmatpush1.bf16.msra.mxu0 0
    %256 = vmatprep.subr.bf16.mxu0 0
    %257 = vmatpush1.bf16.msra.mxu0 0
    %258 = vmatprep.mubr.bf16.mxu0 0
    %259 = vmatmul.mubr.bf16.gmra.mrb[0].mxu0 %v87
    %v260 = vpop.f32.mrb[0].mxu0
    %v261 = vadd.f32 0.0, %v260
    %v262 = vpop.f32.mrb[0].mxu0
    %v263 = vpop.f32.mrb[0].mxu0
    %v264 = vadd.f32 0.0, %v263
    %v265 = vpop.f32.mrb[0].mxu0
    %266 = vdwg.mxu0
    %v267 = vadd.f32 %v160, %v261
    %v268 = vadd.f32 %v161, %v264
    %vm269 = vcmask 64512
    %270 = vst.msk [vmem:[#allocation4] sm:$0xff] %vm269, %v267
    %271 = vst.msk [vmem:[#allocation4 + $0x8] sm:$0xff] %vm269, %v268
    %v272 = vld [vmem:[#allocation5] sm:$0xff]
    %v273 = vld [vmem:[#allocation5 + $0x8] sm:$0xff]
    %274 = vadd.xlane.f32.xlu0 %v85
    %v275 = vpop.xlane.xlu0 %274
    %276 = vadd.xlane.f32.xlu0 %v86
    %v277 = vpop.xlane.xlu0 %276
    %v278 = vadd.f32 %v272, %v275
    %v279 = vadd.f32 %v273, %v277
    %vm280 = vcmask 7168
    %281 = vst.msk [vmem:[#allocation5] sm:$0xff] %vm280, %v278
    %282 = vst.msk [vmem:[#allocation5 + $0x8] sm:$0xff] %vm280, %v279
    // Predicated region
    $region53: #{tpu_custom_call.1} parent=1 // pred_check
      %p283 = pneg %p44
    $region54: #{tpu_custom_call.1} parent=1 // pred_check_branch
      %285 = sbr.rel (%p283) target = $region56
    $region55: #{tpu_custom_call.1} parent=1 // pred_region
      %s286 = scalar_lea.vmem %s4, %s71
      %v287 = vld [vmem:[%s286] sm:$0xff]
      %v288 = vld [vmem:[%s286 + $0x8] sm:$0xff]
      %v289 = vld [vmem:[#allocation5] sm:$0xff]
      %v290 = vld [vmem:[#allocation5 + $0x8] sm:$0xff]
      %v291 = vpack.c.bf16 %v288, %v287
      %v292 = vld [vmem:[%s5] sm:$0xf]
      %v293 = vld [vmem:[%s5 + $0x4] sm:$0xf]
      %v294 = vld [vmem:[%s3] sm:$0xf]
      %v295 = vld [vmem:[%s3 + $0x4] sm:$0xf]
      %v296 = vld [vmem:[%s6] sm:$0xf]
      %v299 = vunpack.c.l.b16 %v294
      %v300 = vunpack.c.l.b16 %v295
      %v301 = vpack.c.b16 %v300, %v299
      %v303 = vsel %vm269, %v301, 0
      %vm305 = vcmask 1043456
      %v307 = vsel %vm305, %v296, 0
      %309 = vmatprep.subr.bf16.mxu0 0
      %310 = vmatpush1.bf16.msra.mxu0 %v307
      %311 = vmatprep.subr.bf16.mxu0 0
      %312 = vmatpush1.bf16.msra.mxu0 0
      %313 = vmatprep.subr.bf16.mxu0 0
      %314 = vmatpush1.bf16.msra.mxu0 0
      %315 = vmatprep.subr.bf16.mxu0 0
      %316 = vmatpush1.bf16.msra.mxu0 0
      %317 = vmatprep.subr.bf16.mxu0 0
      %318 = vmatpush1.bf16.msra.mxu0 0
      %319 = vmatprep.subr.bf16.mxu0 0
      %320 = vmatpush1.bf16.msra.mxu0 0
      %321 = vmatprep.subr.bf16.mxu0 0
      %322 = vmatpush1.bf16.msra.mxu0 0
      %323 = vmatprep.subr.bf16.mxu0 0
      %324 = vmatpush1.bf16.msra.mxu0 0
      %325 = vmatprep.subr.bf16.mxu0 0
      %326 = vmatpush1.bf16.msra.mxu0 0
      %327 = vmatprep.subr.bf16.mxu0 0
      %328 = vmatpush1.bf16.msra.mxu0 0
      %329 = vmatprep.subr.bf16.mxu0 0
      %330 = vmatpush1.bf16.msra.mxu0 0
      %331 = vmatprep.subr.bf16.mxu0 0
      %332 = vmatpush1.bf16.msra.mxu0 0
      %333 = vmatprep.subr.bf16.mxu0 0
      %334 = vmatpush1.bf16.msra.mxu0 0
      %335 = vmatprep.subr.bf16.mxu0 0
      %336 = vmatpush1.bf16.msra.mxu0 0
      %337 = vmatprep.subr.bf16.mxu0 0
      %338 = vmatpush1.bf16.msra.mxu0 0
      %339 = vmatprep.subr.bf16.mxu0 0
      %340 = vmatpush1.bf16.msra.mxu0 0
      %341 = vmatprep.mubr.bf16.mxu0 0
      %342 = vmatmul.mubr.bf16.gmra.mrb[0].mxu0 %v303
      %v343 = vpop.f32.mrb[0].mxu0
      %v344 = vadd.f32 0.0, %v343
      %v345 = vpop.f32.mrb[0].mxu0
      %v346 = vpop.f32.mrb[0].mxu0
      %v347 = vadd.f32 0.0, %v346
      %v348 = vpop.f32.mrb[0].mxu0
      %349 = vdwg.mxu0
      %v352 = vunpack.c.l.b16 %v292
      %v353 = vunpack.c.l.b16 %v293
      %v354 = vpack.c.b16 %v353, %v352
      %v357 = vsel %vm157, %v291, 0
      %359 = vmatprep.subr.bf16.mxu0 0
      %360 = vmatpush1.bf16.msra.mxu0 %v354
      %361 = vmatprep.subr.bf16.mxu0 0
      %362 = vmatpush1.bf16.msra.mxu0 0
      %363 = vmatprep.subr.bf16.mxu0 0
      %364 = vmatpush1.bf16.msra.mxu0 0
      %365 = vmatprep.subr.bf16.mxu0 0
      %366 = vmatpush1.bf16.msra.mxu0 0
      %367 = vmatprep.subr.bf16.mxu0 0
      %368 = vmatpush1.bf16.msra.mxu0 0
      %369 = vmatprep.subr.bf16.mxu0 0
      %370 = vmatpush1.bf16.msra.mxu0 0
      %371 = vmatprep.subr.bf16.mxu0 0
      %372 = vmatpush1.bf16.msra.mxu0 0
      %373 = vmatprep.subr.bf16.mxu0 0
      %374 = vmatpush1.bf16.msra.mxu0 0
      %375 = vmatprep.subr.bf16.mxu0 0
      %376 = vmatpush1.bf16.msra.mxu0 0
      %377 = vmatprep.subr.bf16.mxu0 0
      %378 = vmatpush1.bf16.msra.mxu0 0
      %379 = vmatprep.subr.bf16.mxu0 0
      %380 = vmatpush1.bf16.msra.mxu0 0
      %381 = vmatprep.subr.bf16.mxu0 0
      %382 = vmatpush1.bf16.msra.mxu0 0
      %383 = vmatprep.subr.bf16.mxu0 0
      %384 = vmatpush1.bf16.msra.mxu0 0
      %385 = vmatprep.subr.bf16.mxu0 0
      %386 = vmatpush1.bf16.msra.mxu0 0
      %387 = vmatprep.subr.bf16.mxu0 0
      %388 = vmatpush1.bf16.msra.mxu0 0
      %389 = vmatprep.subr.bf16.mxu0 0
      %390 = vmatpush1.bf16.msra.mxu0 0
      %391 = vmatprep.mubr.bf16.mxu0 0
      %392 = vmatmul.mubr.bf16.gmra.mrb[0].mxu0 %v357
      %v393 = vpop.f32.mrb[0].mxu0
      %v394 = vadd.f32 %v344, %v393
      %v395 = vpop.f32.mrb[0].mxu0
      %v396 = vpop.f32.mrb[0].mxu0
      %v397 = vadd.f32 %v347, %v396
      %v398 = vpop.f32.mrb[0].mxu0
      %399 = vdwg.mxu0
      %v400 = vld [vmem:[#allocation3] sm:$0xff]
      %v401 = vld [vmem:[#allocation3 + $0x8] sm:$0xff]
      %v402 = vpack.c.bf16 %v401, %v400
      %v403 = vld [vmem:[%s7] sm:$0xf]
      %v404 = vld [vmem:[%s7 + $0x4] sm:$0xf]
      %v407 = vunpack.c.l.b16 %v403
      %v408 = vunpack.c.l.b16 %v404
      %v409 = vpack.c.b16 %v408, %v407
      %v412 = vsel %vm157, %v402, 0
      %414 = vmatprep.subr.bf16.mxu0 0
      %415 = vmatpush1.bf16.msra.mxu0 %v409
      %416 = vmatprep.subr.bf16.mxu0 0
      %417 = vmatpush1.bf16.msra.mxu0 0
      %418 = vmatprep.subr.bf16.mxu0 0
      %419 = vmatpush1.bf16.msra.mxu0 0
      %420 = vmatprep.subr.bf16.mxu0 0
      %421 = vmatpush1.bf16.msra.mxu0 0
      %422 = vmatprep.subr.bf16.mxu0 0
      %423 = vmatpush1.bf16.msra.mxu0 0
      %424 = vmatprep.subr.bf16.mxu0 0
      %425 = vmatpush1.bf16.msra.mxu0 0
      %426 = vmatprep.subr.bf16.mxu0 0
      %427 = vmatpush1.bf16.msra.mxu0 0
      %428 = vmatprep.subr.bf16.mxu0 0
      %429 = vmatpush1.bf16.msra.mxu0 0
      %430 = vmatprep.subr.bf16.mxu0 0
      %431 = vmatpush1.bf16.msra.mxu0 0
      %432 = vmatprep.subr.bf16.mxu0 0
      %433 = vmatpush1.bf16.msra.mxu0 0
      %434 = vmatprep.subr.bf16.mxu0 0
      %435 = vmatpush1.bf16.msra.mxu0 0
      %436 = vmatprep.subr.bf16.mxu0 0
      %437 = vmatpush1.bf16.msra.mxu0 0
      %438 = vmatprep.subr.bf16.mxu0 0
      %439 = vmatpush1.bf16.msra.mxu0 0
      %440 = vmatprep.subr.bf16.mxu0 0
      %441 = vmatpush1.bf16.msra.mxu0 0
      %442 = vmatprep.subr.bf16.mxu0 0
      %443 = vmatpush1.bf16.msra.mxu0 0
      %444 = vmatprep.subr.bf16.mxu0 0
      %445 = vmatpush1.bf16.msra.mxu0 0
      %446 = vmatprep.mubr.bf16.mxu0 0
      %447 = vmatmul.mubr.bf16.gmra.mrb[0].mxu0 %v412
      %v448 = vpop.f32.mrb[0].mxu0
      %v449 = vadd.f32 0.0, %v448
      %v450 = vpop.f32.mrb[0].mxu0
      %v451 = vpop.f32.mrb[0].mxu0
      %v452 = vadd.f32 0.0, %v451
      %v453 = vpop.f32.mrb[0].mxu0
      %454 = vdwg.mxu0
      %v455 = vadd.f32 %v394, %v449
      %v456 = vadd.f32 %v397, %v452
      %v457 = vld [vmem:[#allocation4] sm:$0xff]
      %v458 = vld [vmem:[#allocation4 + $0x8] sm:$0xff]
      %v459 = vpack.c.bf16 %v458, %v457
      %v460 = vld [vmem:[%s8] sm:$0xf]
      %v462 = vsel %vm269, %v459, 0
      %v465 = vsel %vm305, %v460, 0
      %467 = vmatprep.subr.bf16.mxu0 0
      %468 = vmatpush1.bf16.msra.mxu0 %v465
      %469 = vmatprep.subr.bf16.mxu0 0
      %470 = vmatpush1.bf16.msra.mxu0 0
      %471 = vmatprep.subr.bf16.mxu0 0
      %472 = vmatpush1.bf16.msra.mxu0 0
      %473 = vmatprep.subr.bf16.mxu0 0
      %474 = vmatpush1.bf16.msra.mxu0 0
      %475 = vmatprep.subr.bf16.mxu0 0
      %476 = vmatpush1.bf16.msra.mxu0 0
      %477 = vmatprep.subr.bf16.mxu0 0
      %478 = vmatpush1.bf16.msra.mxu0 0
      %479 = vmatprep.subr.bf16.mxu0 0
      %480 = vmatpush1.bf16.msra.mxu0 0
      %481 = vmatprep.subr.bf16.mxu0 0
      %482 = vmatpush1.bf16.msra.mxu0 0
      %483 = vmatprep.subr.bf16.mxu0 0
      %484 = vmatpush1.bf16.msra.mxu0 0
      %485 = vmatprep.subr.bf16.mxu0 0
      %486 = vmatpush1.bf16.msra.mxu0 0
      %487 = vmatprep.subr.bf16.mxu0 0
      %488 = vmatpush1.bf16.msra.mxu0 0
      %489 = vmatprep.subr.bf16.mxu0 0
      %490 = vmatpush1.bf16.msra.mxu0 0
      %491 = vmatprep.subr.bf16.mxu0 0
      %492 = vmatpush1.bf16.msra.mxu0 0
      %493 = vmatprep.subr.bf16.mxu0 0
      %494 = vmatpush1.bf16.msra.mxu0 0
      %495 = vmatprep.subr.bf16.mxu0 0
      %496 = vmatpush1.bf16.msra.mxu0 0
      %497 = vmatprep.subr.bf16.mxu0 0
      %498 = vmatpush1.bf16.msra.mxu0 0
      %499 = vmatprep.mubr.bf16.mxu0 0
      %500 = vmatmul.mubr.bf16.gmra.mrb[0].mxu0 %v462
      %v501 = vpop.f32.mrb[0].mxu0
      %v502 = vadd.f32 0.0, %v501
      %v503 = vpop.f32.mrb[0].mxu0
      %v504 = vpop.f32.mrb[0].mxu0
      %v505 = vadd.f32 0.0, %v504
      %v506 = vpop.f32.mrb[0].mxu0
      %507 = vdwg.mxu0
      %v508 = vadd.f32 %v455, %v502
      %v509 = vadd.f32 %v456, %v505
      %v510 = vld [vmem:[%s9] sm:$0x1]
      %512 = vset.pattern.permute.xlu0 0
      %513 = vperm.xlu0 %512, %v289
      %v514 = vpop.permute.xlu0 %513
      %517 = vset.pattern.permute.xlu0 0
      %518 = vperm.xlu0 %517, %v290
      %v519 = vpop.permute.xlu0 %518
      %v522 = vlaneseq
      %v523 = vshrl.u32 %v522, 7
      %v524 = vsub.s32 0, %v523
      %v525 = vrot.slane %v510, %v524
      %v527 = vmul.f32 %v514, %v525
      %v528 = vmul.f32 %v519, %v525
      %v529 = vadd.f32 %v508, %v527
      %v530 = vadd.f32 %v509, %v528
      %v531 = vld [vmem:[%s10] sm:$0x1]
      %v533 = vlaneseq
      %v534 = vshrl.u32 %v533, 7
      %v535 = vsub.s32 0, %v534
      %v536 = vrot.slane %v531, %v535
      %v538 = vadd.f32 %v529, %v536
      %v539 = vadd.f32 %v530, %v536
      %v540 = vmax.f32 %v538, 0.0
      %v541 = vmax.f32 %v539, 0.0
      %vm542 = vcmp.gt.f32.partialorder %v289, 0.0
      %vm543 = vcmp.gt.f32.partialorder %v290, 0.0
      %v544 = vsel %vm542, 1, 0
      %v545 = vsel %vm543, 1, 0
      %546 = vset.pattern.permute.xlu0 0
      %547 = vperm.xlu0 %546, %v544
      %v548 = vpop.permute.xlu0 %547
      %549 = vset.pattern.permute.xlu0 0
      %550 = vperm.xlu0 %549, %v545
      %v551 = vpop.permute.xlu0 %550
      %vm552 = vcmp.eq.s32.totalorder %v548, 1
      %vm553 = vcmp.eq.s32.totalorder %v551, 1
      %v554 = vsel %vm552, %v540, %v287
      %v555 = vsel %vm553, %v541, %v288
      %556 = vst.msk [vmem:[#allocation8] sm:$0xff] %vm157, %v554
      %557 = vst.msk [vmem:[#allocation8 + $0x8] sm:$0xff] %vm157, %v555
    $region56: #{tpu_custom_call.1} parent=1 // pred_fallthru
      _
    // Predicated region
    $region57: #{tpu_custom_call.1} parent=1 // pred_check
      _
    $region58: #{tpu_custom_call.1} parent=1 // pred_check_branch
      %559 = sbr.rel (0) target = $region60
    $region59: #{tpu_custom_call.1} parent=1 // pred_region
      %s561 = ssub.s32 256, 256
      %562 = vsyncadd [#allocation9], %s561
      %s563 = sshll.u32 [#allocation8], 4
      %s564 = int_to_ptr.vmem [resolvable:$true] %s563
      %569 = dma.vmem_to_hbm [thread:$0]  %s564, 256, %s11, [#allocation9], 128, 128, 8
    $region60: #{tpu_custom_call.1} parent=1 // pred_fallthru
      _
    // Predicated region
    $region61: #{tpu_custom_call.1} parent=1 // pred_check
      _
    $region62: #{tpu_custom_call.1} parent=1 // pred_check_branch
      %571 = sbr.rel (0) target = $region64
    $region63: #{tpu_custom_call.1} parent=1 // pred_region
      %572 = dma.done [#allocation9], 256
    $region64: #{tpu_custom_call.1} parent=1 // pred_fallthru
      _
    %573 = vsyncpa [#allocation9], 1

</llo_original>
